<compile_context>
chip_gen: v7x
topology: tpu7x:2x2x1
jax: 0.10.0
libtpu: 0.0.40
codegen_flags: <defaults>
</compile_context>

<pallas_src>
import functools

import jax
import jax.numpy as jnp
from jax.experimental import pallas as pl
from jax.experimental.pallas import tpu as pltpu

SUBLANE = 8            # f32 sublane count (second-to-last dim granularity)
_MIN_SPLIT_BATCH = 512  # batch size above which we force >=2 grid steps (v7x dual-TC)


def _round_up(x, m):
    return (x + m - 1) // m * m


def diag_gaussian_mean_kernel(x_ref, w_ref, b_ref, mean_ref):
    # mean = tanh(x @ W + b); small K/N occupy a sliver of the MXU, which is fine —
    # this problem is memory-bound, not MXU-bound.
    lin = jnp.dot(x_ref[...], w_ref[...], preferred_element_type=jnp.float32)
    mean_ref[...] = jnp.tanh(lin + b_ref[...]).astype(mean_ref.dtype)


@functools.partial(jax.jit, static_argnames=("tile_m",))
def diag_gaussian_forward(x, w_t, lin_bias, logstd_bias, *, tile_m=4096):
    """x: (B, num_inputs); w_t: (num_inputs, num_outputs); biases: (num_outputs,).

    Returns (mean, scale_row):
      mean      : (B, num_outputs) f32  — tanh(x @ W + b)
      scale_row : (num_outputs,)   f32  — exp(0.5 * tanh(logstd_bias)); broadcasts
                  against mean exactly as Normal(mean, logstd.tanh().exp().sqrt()).
    """
    B, K = x.shape
    K_w, N = w_t.shape
    assert K == K_w

    x32 = x.astype(jnp.float32)
    w32 = w_t.astype(jnp.float32)
    b32 = lin_bias.astype(jnp.float32).reshape(1, N)

    out_shape = jax.ShapeDtypeStruct((B, N), jnp.float32)
    cost = pl.CostEstimate(
        flops=2 * B * K * N,
        transcendentals=B * N,
        bytes_accessed=4 * (B * K + K * N + N + B * N),
    )

    # Batch tile: multiple of 8 sublanes, capped by B. No K/N padding anywhere —
    # block last dims equal the full array dims, which satisfies the (8,128) rule.
    tm = min(_round_up(tile_m, SUBLANE), _round_up(B, SUBLANE))
    # v7x has 2 TensorCores: a single-block launch pins everything to one TC, so
    # if the batch is large but fits one tile, split it into two "parallel" steps.
    if pl.cdiv(B, tm) < 2 and B >= _MIN_SPLIT_BATCH:
        tm = _round_up(pl.cdiv(B, 2), SUBLANE)
    num_blocks = pl.cdiv(B, tm)

    if num_blocks == 1:
        # Single block: no grid, no pipeline machinery — whole problem in VMEM.
        mean = pl.pallas_call(
            diag_gaussian_mean_kernel,
            out_shape=out_shape,
            in_specs=[
                pl.BlockSpec(memory_space=pltpu.MemorySpace.VMEM),
                pl.BlockSpec(memory_space=pltpu.MemorySpace.VMEM),
                pl.BlockSpec(memory_space=pltpu.MemorySpace.VMEM),
            ],
            out_specs=pl.BlockSpec(memory_space=pltpu.MemorySpace.VMEM),
            cost_estimate=cost,
        )(x32, w32, b32)
    else:
        # Streaming over the batch; W and bias stay VMEM-resident across steps.
        # Ragged last block (B % tm != 0) is fine: OOB output rows are masked on
        # write, and garbage input rows never contaminate valid rows.
        mean = pl.pallas_call(
            diag_gaussian_mean_kernel,
            out_shape=out_shape,
            grid=(num_blocks,),
            in_specs=[
                pl.BlockSpec((tm, K), lambda i: (i, 0)),
                pl.BlockSpec((K, N), lambda i: (0, 0)),
                pl.BlockSpec((1, N), lambda i: (0, 0)),
            ],
            out_specs=pl.BlockSpec((tm, N), lambda i: (i, 0)),
            compiler_params=pltpu.CompilerParams(
                dimension_semantics=("parallel",),  # shards across 2 TCs on v7x
            ),
            cost_estimate=cost,
        )(x32, w32, b32)

    # scale = exp(0.5 * tanh(logstd_bias)) — x-independent row; never broadcast to
    # (B, N) in HBM, the distribution's broadcasting handles it.
    scale_row = jnp.exp(0.5 * jnp.tanh(logstd_bias.astype(jnp.float32)))
    return mean, scale_row


def init_params(key, num_inputs, num_outputs):
    """Deterministic init matching the module: init_normc_ weight, zero biases."""
    # init_normc_: W ~ N(0,1) with shape (out, in), each row scaled to unit L2 norm.
    w = jax.random.normal(key, (num_outputs, num_inputs), dtype=jnp.float32)
    w = w / jnp.sqrt(jnp.sum(w * w, axis=1, keepdims=True))
    lin_bias = jnp.zeros((num_outputs,), dtype=jnp.float32)       # constant_(x, 0)
    logstd_bias = jnp.zeros((num_outputs,), dtype=jnp.float32)    # AddBias(zeros)
    return w.T, lin_bias, logstd_bias                             # W pre-transposed


def _reference(x, w_t, lin_bias, logstd_bias):
    mean = jnp.tanh(x.astype(jnp.float32) @ w_t.astype(jnp.float32) + lin_bias[None, :])
    scale_row = jnp.exp(0.5 * jnp.tanh(logstd_bias.astype(jnp.float32)))
    return mean, scale_row


if __name__ == "__main__":
    key = jax.random.PRNGKey(0)
    k_x, k_w, k_x2, k_x3 = jax.random.split(key, 4)

    num_inputs, num_outputs = 32, 8
    w_t, lin_bias, logstd_bias = init_params(k_w, num_inputs, num_outputs)

    # --- Small batch: single-block, no-grid path. ---
    B = 8
    x = jax.random.normal(k_x, (B, num_inputs), dtype=jnp.float32)
    mean, scale = diag_gaussian_forward(x, w_t, lin_bias, logstd_bias)
    jax.block_until_ready((mean, scale))
    ref_mean, ref_scale = _reference(x, w_t, lin_bias, logstd_bias)
    assert mean.shape == (B, num_outputs) and scale.shape == (num_outputs,)
    assert jnp.allclose(mean, ref_mean, atol=1e-5, rtol=1e-5)
    assert jnp.allclose(scale, ref_scale, atol=1e-5, rtol=1e-5)

    # --- Ragged batch-tiled grid path (B not a multiple of the tile). ---
    B2 = 1000
    x2 = jax.random.normal(k_x2, (B2, num_inputs), dtype=jnp.float32)
    mean2, scale2 = diag_gaussian_forward(x2, w_t, lin_bias, logstd_bias, tile_m=256)
    jax.block_until_ready((mean2, scale2))
    ref_mean2, _ = _reference(x2, w_t, lin_bias, logstd_bias)
    assert mean2.shape == (B2, num_outputs)
    assert jnp.allclose(mean2, ref_mean2, atol=1e-5, rtol=1e-5)

    # --- Large batch that fits one tile: forced 2-step "parallel" grid (v7x). ---
    B3 = 1024
    x3 = jax.random.normal(k_x3, (B3, num_inputs), dtype=jnp.float32)
    mean3, scale3 = diag_gaussian_forward(x3, w_t, lin_bias, logstd_bias)
    jax.block_until_ready((mean3, scale3))
    ref_mean3, _ = _reference(x3, w_t, lin_bias, logstd_bias)
    assert mean3.shape == (B3, num_outputs)
    assert jnp.allclose(mean3, ref_mean3, atol=1e-5, rtol=1e-5)
    assert jnp.allclose(scale3, ref_scale, atol=1e-5, rtol=1e-5)

    print("KERNEL_OK")
</pallas_src>

<mosaic_0001>
module attributes {stable_mosaic.version = 11 : i64} {
  func.func @diag_gaussian_mean_kernel(%arg0: memref<8x32xf32, #tpu.memory_space<vmem>>, %arg1: memref<32x8xf32, #tpu.memory_space<vmem>>, %arg2: memref<1x8xf32, #tpu.memory_space<vmem>>, %arg3: memref<8x8xf32, #tpu.memory_space<vmem>>) attributes {dimension_semantics = [], scalar_prefetch = 0 : i64, scratch_operands = 0 : i64, tpu.core_type = #tpu.core_type<tc>} {
    %c0 = arith.constant 0 : index
    %c0_0 = arith.constant 0 : index
    %0 = vector.load %arg0[%c0, %c0_0] : memref<8x32xf32, #tpu.memory_space<vmem>>, vector<8x32xf32>
    %c0_1 = arith.constant 0 : index
    %c0_2 = arith.constant 0 : index
    %1 = vector.load %arg1[%c0_1, %c0_2] : memref<32x8xf32, #tpu.memory_space<vmem>>, vector<32x8xf32>
    %cst = arith.constant dense<0.000000e+00> : vector<8x8xf32>
    %2 = tpu.matmul %0, %1, %cst {dimension_numbers = #tpu.dot_dimension_numbers<[1], [0], [0], [1], [0, 0, 1, 1], [], []>} : vector<8x32xf32>, vector<32x8xf32>, vector<8x8xf32> -> vector<8x8xf32>
    %c0_3 = arith.constant 0 : index
    %c0_4 = arith.constant 0 : index
    %3 = vector.load %arg2[%c0_3, %c0_4] : memref<1x8xf32, #tpu.memory_space<vmem>>, vector<1x8xf32>
    %4 = vector.broadcast %3 : vector<1x8xf32> to vector<8x8xf32>
    %5 = arith.addf %2, %4 : vector<8x8xf32>
    %6 = math.tanh %5 : vector<8x8xf32>
    %c0_5 = arith.constant 0 : index
    %c0_6 = arith.constant 0 : index
    %7 = vector.load %arg3[%c0_5, %c0_6] : memref<8x8xf32, #tpu.memory_space<vmem>>, vector<8x8xf32>
    tpu.vector_store %arg3[%c0_5, %c0_6], %6 {strides = array<i32>} : memref<8x8xf32, #tpu.memory_space<vmem>>, vector<8x8xf32>,
    return
  }
}

</mosaic_0001>

<llo_original>
// kernel: diag_gaussian_forward.1
$region0: #{diag_gaussian_forward.1}
  #allocation0 [shape = 'u32[]', space=smem, size = 0x4, offset = 0x4, fixed_abs, tag = 'smem constant byte address 0x4 - core index']
  #allocation1 [shape = 'u32[144,128]{1,0:T(1,128)}', space=vmem, size = 0x12000, scoped, tag = 'internal scratch']
  %s0 = inlined_call_operand.vmem [shape: f32[8,32], index: 0, kind: input, shape index: {}]
  %s1 = inlined_call_operand.vmem [shape: f32[32,8], index: 1, kind: input, shape index: {}]
  %s2 = inlined_call_operand.vmem [shape: f32[1,8], index: 2, kind: input, shape index: {}]
  %s3 = inlined_call_operand.hbm [shape: f32[8,8], index: 3, kind: output, shape index: {}]
  %s4 = sld [smem:[#allocation0]]
  $region22: #{diag_gaussian_forward.1} parent=0
    _
  %s6 = ssub.s32 1, %s4
  %s7 = scalar_select 0, %s6, %s4
  $region1: #{diag_gaussian_forward.1} parent=0
    #allocation2 [shape = 'u8[4096]{0}', space=vmem, size = 0x1000, scoped, tag = 'output window, operand 0, single buffered']
    #allocation3 [shape = 's32[1]{0}', space=sflag, size = 0x4, scoped, tag = 'scoped memory for diag_gaussian_forward.1']
    %8 = vsyncpa [#allocation3], 0
    // Predicated region
    $region2: #{diag_gaussian_forward.1} parent=1 // pred_check
      _
    $region3: #{diag_gaussian_forward.1} parent=1 // pred_check_branch
      %10 = sbr.rel (0) target = $region5
    $region4: #{diag_gaussian_forward.1} parent=1 // pred_region
      _
    $region5: #{diag_gaussian_forward.1} parent=1 // pred_fallthru
      _
    // Predicated region
    $region6: #{diag_gaussian_forward.1} parent=1 // pred_check
      _
    $region7: #{diag_gaussian_forward.1} parent=1 // pred_check_branch
      %12 = sbr.rel (0) target = $region9
    $region8: #{diag_gaussian_forward.1} parent=1 // pred_region
      _
    $region9: #{diag_gaussian_forward.1} parent=1 // pred_fallthru
      _
    // Predicated region
    $region10: #{diag_gaussian_forward.1} parent=1 // pred_check
      _
    $region11: #{diag_gaussian_forward.1} parent=1 // pred_check_branch
      %14 = sbr.rel (0) target = $region13
    $region12: #{diag_gaussian_forward.1} parent=1 // pred_region
      _
    $region13: #{diag_gaussian_forward.1} parent=1 // pred_fallthru
      _
    %v15 = vld [vmem:[%s0] sm:$0xff]
    %v16 = vld [vmem:[%s1] sm:$0xff]
    %v17 = vld [vmem:[%s1 + $0x8] sm:$0xff]
    %v18 = vld [vmem:[%s1 + $0x10] sm:$0xff]
    %v19 = vld [vmem:[%s1 + $0x18] sm:$0xff]
    %v20 = vld [vmem:[%s2] sm:$0x1]
    %v22 = vlaneseq
    %v23 = vshrl.u32 %v22, 7
    %v24 = vsub.s32 0, %v23
    %v25 = vrot.slane %v20, %v24
    %vm27 = vcmask 261120
    %v29 = vsel %vm27, %v15, 0
    %31 = vmatprep.subr.mxu0 0.0
    %32 = vmatpush1.msra.mxu0 %v16
    %33 = vmatprep.subr.mxu0 0.0
    %34 = vmatpush1.msra.mxu0 %v17
    %35 = vmatprep.subr.mxu0 0.0
    %36 = vmatpush1.msra.mxu0 %v18
    %37 = vmatprep.subr.mxu0 0.0
    %38 = vmatpush1.msra.mxu0 %v19
    %39 = vmatprep.subr.mxu0 0.0
    %40 = vmatpush1.msra.mxu0 0.0
    %41 = vmatprep.subr.mxu0 0.0
    %42 = vmatpush1.msra.mxu0 0.0
    %43 = vmatprep.subr.mxu0 0.0
    %44 = vmatpush1.msra.mxu0 0.0
    %45 = vmatprep.subr.mxu0 0.0
    %46 = vmatpush1.msra.mxu0 0.0
    %47 = vmatprep.subr.mxu0 0.0
    %48 = vmatpush1.msra.mxu0 0.0
    %49 = vmatprep.subr.mxu0 0.0
    %50 = vmatpush1.msra.mxu0 0.0
    %51 = vmatprep.subr.mxu0 0.0
    %52 = vmatpush1.msra.mxu0 0.0
    %53 = vmatprep.subr.mxu0 0.0
    %54 = vmatpush1.msra.mxu0 0.0
    %55 = vmatprep.subr.mxu0 0.0
    %56 = vmatpush1.msra.mxu0 0.0
    %57 = vmatprep.subr.mxu0 0.0
    %58 = vmatpush1.msra.mxu0 0.0
    %59 = vmatprep.subr.mxu0 0.0
    %60 = vmatpush1.msra.mxu0 0.0
    %61 = vmatprep.subr.mxu0 0.0
    %62 = vmatpush1.msra.mxu0 0.0
    %63 = vmatprep.subr.mxu0 0.0
    %64 = vmatpush1.msra.mxu0 0.0
    %65 = vmatprep.subr.mxu0 0.0
    %66 = vmatpush1.msra.mxu0 0.0
    %67 = vmatprep.subr.mxu0 0.0
    %68 = vmatpush1.msra.mxu0 0.0
    %69 = vmatprep.subr.mxu0 0.0
    %70 = vmatpush1.msra.mxu0 0.0
    %71 = vmatprep.subr.mxu0 0.0
    %72 = vmatpush1.msra.mxu0 0.0
    %73 = vmatprep.subr.mxu0 0.0
    %74 = vmatpush1.msra.mxu0 0.0
    %75 = vmatprep.subr.mxu0 0.0
    %76 = vmatpush1.msra.mxu0 0.0
    %77 = vmatprep.subr.mxu0 0.0
    %78 = vmatpush1.msra.mxu0 0.0
    %79 = vmatprep.subr.mxu0 0.0
    %80 = vmatpush1.msra.mxu0 0.0
    %81 = vmatprep.subr.mxu0 0.0
    %82 = vmatpush1.msra.mxu0 0.0
    %83 = vmatprep.subr.mxu0 0.0
    %84 = vmatpush1.msra.mxu0 0.0
    %85 = vmatprep.subr.mxu0 0.0
    %86 = vmatpush1.msra.mxu0 0.0
    %87 = vmatprep.subr.mxu0 0.0
    %88 = vmatpush1.msra.mxu0 0.0
    %89 = vmatprep.subr.mxu0 0.0
    %90 = vmatpush1.msra.mxu0 0.0
    %91 = vmatprep.subr.mxu0 0.0
    %92 = vmatpush1.msra.mxu0 0.0
    %93 = vmatprep.subr.mxu0 0.0
    %94 = vmatpush1.msra.mxu0 0.0
    %95 = vmatprep.mubr.f32.mxu0 0.0
    %96 = vmatmul.mubr.f32.gmra.mrb[0].mxu0 %v29
    %v97 = vpop.f32.mrb[0].mxu0
    %v98 = vadd.f32 %v25, %v97
    %v99 = vpop.f32.mrb[0].mxu0
    %100 = vdwg.mxu0
    %v101 = vtanh.pop %v98
    %vm102 = vcmask 64512
    %103 = vst.msk [vmem:[#allocation2] sm:$0xff] %vm102, %v101
    // Predicated region
    $region14: #{diag_gaussian_forward.1} parent=1 // pred_check
      _
    $region15: #{diag_gaussian_forward.1} parent=1 // pred_check_branch
      %105 = sbr.rel (0) target = $region17
    $region16: #{diag_gaussian_forward.1} parent=1 // pred_region
      %s107 = ssub.s32 128, 128
      %108 = vsyncadd [#allocation3], %s107
      %s110 = sshll.u32 [#allocation2], 4
      %s111 = int_to_ptr.vmem [resolvable:$true] %s110
      %113 = dma.vmem_to_hbm [thread:$0]  %s111, 128, %s3, [#allocation3]
    $region17: #{diag_gaussian_forward.1} parent=1 // pred_fallthru
      _
    // Predicated region
    $region18: #{diag_gaussian_forward.1} parent=1 // pred_check
      _
    $region19: #{diag_gaussian_forward.1} parent=1 // pred_check_branch
      %115 = sbr.rel (0) target = $region21
    $region20: #{diag_gaussian_forward.1} parent=1 // pred_region
      %116 = dma.done [#allocation3], 128
    $region21: #{diag_gaussian_forward.1} parent=1 // pred_fallthru
      _
    %117 = vsyncpa [#allocation3], 1

</llo_original>
